<compile_context>
chip_gen: v7x
topology: tpu7x:2x2x1
jax: 0.10.0
libtpu: 0.0.40
codegen_flags: <defaults>
</compile_context>

<pallas_src>
import jax
import jax.numpy as jnp
from jax.experimental import pallas as pl
from jax.experimental.pallas import tpu as pltpu


# -----------------------------------------------------------------------------
# Kernel 1: embedding row gather (scalar-prefetched token ids drive the DMA).
# -----------------------------------------------------------------------------
def _gather_rows_kernel(tok_ref, emb_row_ref, out_ref):
    # tok_ref (SMEM scalar prefetch) is only consumed by the index_maps.
    del tok_ref
    out_ref[...] = emb_row_ref[...]


# -----------------------------------------------------------------------------
# Kernel 2: whole-sequence LSTM recurrence (weights resident, h/c in scratch).
# -----------------------------------------------------------------------------
def _lstm_seq_kernel(x_slab_ref,   # (T_pad, E)  gathered embeddings (param dtype)
                     w_x_ref,      # (E, 4H)     W_ih^T, resident
                     w_h_ref,      # (H, 4H)     W_hh^T, resident
                     b_ref,        # (1, 4H)     b_ih + b_hh (f32), resident
                     hc0_ref,      # (2, H)      [h0; c0] (f32), resident
                     h_seq_ref,    # out block (1, 1, H): hidden at step t
                     hc_n_ref,     # out (2, H): packed [h_n; c_n]
                     xg_ref,       # scratch (T_pad, 4H) f32: input-side gates
                     h_ref,        # scratch (1, H) f32: hidden carry
                     c_ref):       # scratch (1, H) f32: cell carry
    t = pl.program_id(0)
    H = w_h_ref.shape[0]

    @pl.when(t == 0)
    def _init():
        # One tall, MXU-friendly pass for the input-side gates of the whole
        # sequence: (T_pad, E) @ (E, 4H) + bias, f32 accumulation.
        xg_ref[...] = (jnp.dot(x_slab_ref[...], w_x_ref[...],
                               preferred_element_type=jnp.float32)
                       + b_ref[...])
        h_ref[...] = hc0_ref[0:1, :]
        c_ref[...] = hc0_ref[1:2, :]

    h = h_ref[...]                       # (1, H) f32
    c = c_ref[...]                       # (1, H) f32

    # Recurrent-side gates only: (1, H) @ (H, 4H), f32 accumulation.
    gates = xg_ref[pl.ds(t, 1), :] + jnp.dot(
        h.astype(w_h_ref.dtype), w_h_ref[...],
        preferred_element_type=jnp.float32)

    # PyTorch LSTM gate order: i, f, g, o.  Elementwise math stays f32 (v5e).
    i_g = jax.nn.sigmoid(gates[:, 0 * H:1 * H])
    f_g = jax.nn.sigmoid(gates[:, 1 * H:2 * H])
    g_g = jnp.tanh(gates[:, 2 * H:3 * H])
    o_g = jax.nn.sigmoid(gates[:, 3 * H:4 * H])

    c_new = f_g * c + i_g * g_g
    h_new = o_g * jnp.tanh(c_new)

    h_ref[...] = h_new
    c_ref[...] = c_new
    h_seq_ref[0] = h_new                 # lane-dense (1, H) store at step t

    @pl.when(t == pl.num_programs(0) - 1)
    def _finalize():
        hc_n_ref[0:1, :] = h_new
        hc_n_ref[1:2, :] = c_new


# -----------------------------------------------------------------------------
# Parameter prep (hoisted out of the hot path).
# -----------------------------------------------------------------------------
def prepare_encoder_params(emb, w_ih, w_hh, b_ih, b_hh,
                           param_dtype=jnp.float32):
    """One-time parameter prep.

    emb : (V, E); w_ih : (4H, E); w_hh : (4H, H); b_ih/b_hh : (4H,).
    param_dtype: storage dtype for the embedding table and LSTM weights.
      bf16 is valid on v5e, v6e and v7x (MXU takes bf16 operands on all
      generations); gate/state math always stays f32.  Note bf16 also
      quantizes the embedding table (intentional).
    """
    V, E = emb.shape
    H = w_hh.shape[1]
    return {
        # Kept as (V, 1, E) so the gathered block (1, 1, E) has its last two
        # dims equal to the array's last two dims (Pallas block-shape rule).
        "emb": emb.astype(param_dtype).reshape(V, 1, E),
        "w_x": jnp.transpose(w_ih).astype(param_dtype),   # (E, 4H)
        "w_h": jnp.transpose(w_hh).astype(param_dtype),   # (H, 4H)
        "b":   (b_ih + b_hh).astype(jnp.float32).reshape(1, 4 * H),
    }


def _recurrent_vmem_bytes(t_pad, e, h, itemsize):
    g4 = 4 * h
    in_b = (t_pad * e + e * g4 + h * g4) * itemsize + (g4 + 2 * h) * 4
    out_b = (h + 2 * h) * 4
    scr_b = (t_pad * g4 + 2 * h) * 4
    # Factor 2: Pallas double-buffers input/output blocks.
    return 2 * (in_b + out_b) + scr_b


# -----------------------------------------------------------------------------
# Forward wrappers.
# -----------------------------------------------------------------------------
@jax.jit
def encoder_forward_sequence(params, tokens, hidden):
    """Runs the Encoder over a whole token sequence in one fused dispatch.

    tokens: (T,) int ids.  hidden: (h0, c0), each (1, 1, H).
    Returns (outputs, (h_n, c_n)); outputs[t] == Encoder.forward step-t output.
    """
    emb3, w_x, w_h, bias = params["emb"], params["w_x"], params["w_h"], params["b"]
    V, _, E = emb3.shape
    H = w_h.shape[0]
    G4 = 4 * H
    T = int(tokens.shape[0])
    pdtype = w_x.dtype
    itemsize = jnp.dtype(pdtype).itemsize

    # Sublane-align the embedding slab (8 rows for 4-byte, 16 for 2-byte).
    pad_mult = 8 if itemsize >= 4 else 16
    T_pad = ((T + pad_mult - 1) // pad_mult) * pad_mult

    # Clamp ids instead of relying on DMA bounds checks (review concern).
    tok = jnp.clip(jnp.asarray(tokens, jnp.int32).reshape(T), 0, V - 1)
    tok_pad = jnp.pad(tok, (0, T_pad - T))   # padded rows gather row 0; never read

    # ---- Kernel 1: gather T_pad embedding rows (O(T*E) HBM, not O(V*E)) ----
    x_rows = pl.pallas_call(
        _gather_rows_kernel,
        out_shape=jax.ShapeDtypeStruct((T_pad, 1, E), pdtype),
        grid_spec=pltpu.PrefetchScalarGridSpec(
            num_scalar_prefetch=1,
            grid=(T_pad,),
            in_specs=[pl.BlockSpec((1, 1, E), lambda t, ids: (ids[t], 0, 0))],
            out_specs=pl.BlockSpec((1, 1, E), lambda t, ids: (t, 0, 0)),
        ),
        compiler_params=pltpu.CompilerParams(
            dimension_semantics=("parallel",)),   # independent gather steps
    )(tok_pad, emb3)
    x_slab = x_rows.reshape(T_pad, E)             # contiguous reshape

    h0, c0 = hidden
    hc0 = jnp.concatenate([h0.reshape(1, H), c0.reshape(1, H)],
                          axis=0).astype(jnp.float32)

    # ---- VMEM guard (v7x has 64 MiB; default scoped limit is ~32 MiB) ------
    est = _recurrent_vmem_bytes(T_pad, E, H, itemsize)
    if est > 56 * 2**20:
        # TODO(synk): tile the 4H (gate) axis with an extra grid dim and/or
        # chunk the sequence when H/E/T get this large.
        raise ValueError(
            f"Encoder recurrent kernel needs ~{est >> 20} MiB of VMEM; "
            "use bf16 params or tile the gate axis for this size.")
    vmem_limit = None
    if est > 24 * 2**20:
        vmem_limit = min(est + (8 << 20), 60 << 20)

    # ---- Kernel 2: whole-sequence LSTM, weights resident across the grid ---
    h_seq, hc_n = pl.pallas_call(
        _lstm_seq_kernel,
        out_shape=(jax.ShapeDtypeStruct((T, 1, H), jnp.float32),
                   jax.ShapeDtypeStruct((2, H), jnp.float32)),
        grid_spec=pltpu.PrefetchScalarGridSpec(
            num_scalar_prefetch=0,
            grid=(T,),
            in_specs=[
                pl.BlockSpec((T_pad, E), lambda t: (0, 0)),   # embedding slab
                pl.BlockSpec((E, G4),    lambda t: (0, 0)),   # W_ih^T
                pl.BlockSpec((H, G4),    lambda t: (0, 0)),   # W_hh^T
                pl.BlockSpec((1, G4),    lambda t: (0, 0)),   # fused bias
                pl.BlockSpec((2, H),     lambda t: (0, 0)),   # [h0; c0]
            ],
            out_specs=(
                pl.BlockSpec((1, 1, H), lambda t: (t, 0, 0)),  # h per step
                pl.BlockSpec((2, H),    lambda t: (0, 0)),     # packed h_n,c_n
            ),
            scratch_shapes=[
                pltpu.VMEM((T_pad, G4), jnp.float32),   # input-side gates
                pltpu.VMEM((1, H), jnp.float32),        # h carry
                pltpu.VMEM((1, H), jnp.float32),        # c carry
            ],
        ),
        compiler_params=pltpu.CompilerParams(
            dimension_semantics=("arbitrary",),   # recurrence is sequential
            vmem_limit_bytes=vmem_limit),
    )(x_slab, w_x, w_h, bias, hc0)

    h_n = hc_n[0:1, :].reshape(1, 1, H)
    c_n = hc_n[1:2, :].reshape(1, 1, H)
    return h_seq, (h_n, c_n)


def encoder_forward(params, token, hidden):
    """Single-token Encoder.forward(input, hidden) -> (output, (h_n, c_n))."""
    tok = jnp.asarray(token, jnp.int32).reshape((1,))
    h_seq, (h_n, c_n) = encoder_forward_sequence(params, tok, hidden)
    return h_seq.reshape(1, 1, -1), (h_n, c_n)


# -----------------------------------------------------------------------------
# Pure-JAX f32 reference (chained PyTorch-style LSTM steps).
# -----------------------------------------------------------------------------
def _ref_lstm_seq(emb, w_ih, w_hh, b_ih, b_hh, tokens, h, c):
    H = w_hh.shape[1]
    hs = []
    for tok in list(tokens):
        x = emb[int(tok)].reshape(1, -1)
        gates = x @ w_ih.T + h @ w_hh.T + b_ih + b_hh
        i_g = jax.nn.sigmoid(gates[:, 0 * H:1 * H])
        f_g = jax.nn.sigmoid(gates[:, 1 * H:2 * H])
        g_g = jnp.tanh(gates[:, 2 * H:3 * H])
        o_g = jax.nn.sigmoid(gates[:, 3 * H:4 * H])
        c = f_g * c + i_g * g_g
        h = o_g * jnp.tanh(c)
        hs.append(h)
    return jnp.stack(hs, axis=0), h, c


if __name__ == "__main__":
    input_dim = 1000        # vocab size for nn.Embedding
    embedding_dim = 128     # lane-aligned
    hidden_dim = 128        # lane-aligned
    seq_len = 8

    key = jax.random.PRNGKey(0)
    k_emb, k_wih, k_whh, k_bih, k_bhh, k_tok = jax.random.split(key, 6)

    emb = jax.random.normal(k_emb, (input_dim, embedding_dim), jnp.float32) * 0.1
    w_ih = jax.random.normal(k_wih, (4 * hidden_dim, embedding_dim), jnp.float32) * 0.1
    w_hh = jax.random.normal(k_whh, (4 * hidden_dim, hidden_dim), jnp.float32) * 0.1
    b_ih = jax.random.normal(k_bih, (4 * hidden_dim,), jnp.float32) * 0.1
    b_hh = jax.random.normal(k_bhh, (4 * hidden_dim,), jnp.float32) * 0.1

    tokens = jax.random.randint(k_tok, (seq_len,), 0, input_dim, dtype=jnp.int32)

    # init_hidden(): zeros of shape (1, 1, hidden_dim).
    h0 = jnp.zeros((1, 1, hidden_dim), jnp.float32)
    c0 = jnp.zeros((1, 1, hidden_dim), jnp.float32)

    hs_ref, h_ref, c_ref = _ref_lstm_seq(
        emb, w_ih, w_hh, b_ih, b_hh, tokens,
        h0.reshape(1, -1), c0.reshape(1, -1))

    # ---- f32 params: fused whole-sequence kernel ---------------------------
    params_f32 = prepare_encoder_params(emb, w_ih, w_hh, b_ih, b_hh, jnp.float32)
    h_seq, (h_n, c_n) = encoder_forward_sequence(params_f32, tokens, (h0, c0))
    jax.block_until_ready((h_seq, h_n, c_n))

    assert h_seq.shape == (seq_len, 1, hidden_dim)
    assert h_n.shape == (1, 1, hidden_dim) and c_n.shape == (1, 1, hidden_dim)
    assert jnp.allclose(h_seq, hs_ref, atol=2e-4, rtol=2e-4)
    assert jnp.allclose(h_n.reshape(1, -1), h_ref, atol=2e-4, rtol=2e-4)
    assert jnp.allclose(c_n.reshape(1, -1), c_ref, atol=2e-4, rtol=2e-4)

    # ---- single-step API parity (mirrors Encoder.forward exactly) ----------
    out1, (h1, c1) = encoder_forward(params_f32, tokens[0], (h0, c0))
    jax.block_until_ready((out1, h1, c1))
    assert out1.shape == (1, 1, hidden_dim)
    assert jnp.allclose(out1, hs_ref[0:1], atol=2e-4, rtol=2e-4)
    assert jnp.allclose(h1, hs_ref[0:1], atol=2e-4, rtol=2e-4)

    # ---- bf16 weight storage (valid on v5e/v6e/v7x; gate math stays f32) ---
    params_bf16 = prepare_encoder_params(emb, w_ih, w_hh, b_ih, b_hh, jnp.bfloat16)
    h_seq_b, (h_n_b, c_n_b) = encoder_forward_sequence(params_bf16, tokens, (h0, c0))
    jax.block_until_ready((h_seq_b, h_n_b, c_n_b))
    assert jnp.allclose(h_n_b.reshape(1, -1), h_ref, atol=5e-2, rtol=5e-2)
    assert jnp.allclose(c_n_b.reshape(1, -1), c_ref, atol=5e-2, rtol=5e-2)

    print("KERNEL_OK")
</pallas_src>

<mosaic_0001>
module attributes {stable_mosaic.version = 11 : i64} {
  func.func @_lstm_seq_kernel(%arg0: i32, %arg1: memref<8x128xf32, #tpu.memory_space<vmem>>, %arg2: memref<128x512xf32, #tpu.memory_space<vmem>>, %arg3: memref<128x512xf32, #tpu.memory_space<vmem>>, %arg4: memref<1x512xf32, #tpu.memory_space<vmem>>, %arg5: memref<2x128xf32, #tpu.memory_space<vmem>>, %arg6: memref<1x1x128xf32, #tpu.memory_space<vmem>>, %arg7: memref<2x128xf32, #tpu.memory_space<vmem>>, %arg8: memref<8x512xf32, #tpu.memory_space<vmem>>, %arg9: memref<1x128xf32, #tpu.memory_space<vmem>>, %arg10: memref<1x128xf32, #tpu.memory_space<vmem>>) attributes {dimension_semantics = [#tpu.dimension_semantics<arbitrary>], iteration_bounds = array<i64: 8>, scalar_prefetch = 0 : i64, scratch_operands = 3 : i64, tpu.core_type = #tpu.core_type<tc>, window_params = [{pipeline_mode = #tpu.pipeline_mode<synchronous>, transform_indices = @transform_0, window_bounds = array<i64: 8, 128>}, {pipeline_mode = #tpu.pipeline_mode<synchronous>, transform_indices = @transform_1, window_bounds = array<i64: 128, 512>}, {pipeline_mode = #tpu.pipeline_mode<synchronous>, transform_indices = @transform_2, window_bounds = array<i64: 128, 512>}, {pipeline_mode = #tpu.pipeline_mode<synchronous>, transform_indices = @transform_3, window_bounds = array<i64: 1, 512>}, {pipeline_mode = #tpu.pipeline_mode<synchronous>, transform_indices = @transform_4, window_bounds = array<i64: 2, 128>}, {transform_indices = @transform_5, window_bounds = array<i64: 1, 1, 128>}, {pipeline_mode = #tpu.pipeline_mode<synchronous>, transform_indices = @transform_6, window_bounds = array<i64: 2, 128>}]} {
    %c0_i32 = arith.constant 0 : i32
    %0 = arith.cmpi eq, %arg0, %c0_i32 : i32
    %1 = arith.extui %0 : i1 to i32
    %c0_i32_0 = arith.constant 0 : i32
    %2 = arith.cmpi ne, %1, %c0_i32_0 : i32
    scf.if %2 {
      %c0_18 = arith.constant 0 : index
      %c0_19 = arith.constant 0 : index
      %43 = vector.load %arg1[%c0_18, %c0_19] : memref<8x128xf32, #tpu.memory_space<vmem>>, vector<8x128xf32>
      %c0_20 = arith.constant 0 : index
      %c0_21 = arith.constant 0 : index
      %44 = vector.load %arg2[%c0_20, %c0_21] : memref<128x512xf32, #tpu.memory_space<vmem>>, vector<128x512xf32>
      %cst_22 = arith.constant dense<0.000000e+00> : vector<8x512xf32>
      %45 = tpu.matmul %43, %44, %cst_22 {dimension_numbers = #tpu.dot_dimension_numbers<[1], [0], [0], [1], [0, 0, 1, 1], [], []>} : vector<8x128xf32>, vector<128x512xf32>, vector<8x512xf32> -> vector<8x512xf32>
      %c0_23 = arith.constant 0 : index
      %c0_24 = arith.constant 0 : index
      %46 = vector.load %arg4[%c0_23, %c0_24] : memref<1x512xf32, #tpu.memory_space<vmem>>, vector<1x512xf32>
      %47 = vector.broadcast %46 : vector<1x512xf32> to vector<8x512xf32>
      %48 = arith.addf %45, %47 : vector<8x512xf32>
      %c0_25 = arith.constant 0 : index
      %c0_26 = arith.constant 0 : index
      %49 = vector.load %arg8[%c0_25, %c0_26] : memref<8x512xf32, #tpu.memory_space<vmem>>, vector<8x512xf32>
      tpu.vector_store %arg8[%c0_25, %c0_26], %48 {strides = array<i32>} : memref<8x512xf32, #tpu.memory_space<vmem>>, vector<8x512xf32>,
      %c0_27 = arith.constant 0 : index
      %c0_28 = arith.constant 0 : index
      %50 = vector.load %arg5[%c0_27, %c0_28] : memref<2x128xf32, #tpu.memory_space<vmem>>, vector<1x128xf32>
      %c0_29 = arith.constant 0 : index
      %c0_30 = arith.constant 0 : index
      %51 = vector.load %arg9[%c0_29, %c0_30] : memref<1x128xf32, #tpu.memory_space<vmem>>, vector<1x128xf32>
      tpu.vector_store %arg9[%c0_29, %c0_30], %50 {strides = array<i32>} : memref<1x128xf32, #tpu.memory_space<vmem>>, vector<1x128xf32>,
      %c1 = arith.constant 1 : index
      %c0_31 = arith.constant 0 : index
      %52 = vector.load %arg5[%c1, %c0_31] : memref<2x128xf32, #tpu.memory_space<vmem>>, vector<1x128xf32>
      %c0_32 = arith.constant 0 : index
      %c0_33 = arith.constant 0 : index
      %53 = vector.load %arg10[%c0_32, %c0_33] : memref<1x128xf32, #tpu.memory_space<vmem>>, vector<1x128xf32>
      tpu.vector_store %arg10[%c0_32, %c0_33], %52 {strides = array<i32>} : memref<1x128xf32, #tpu.memory_space<vmem>>, vector<1x128xf32>,
    } else {
    }
    %c0 = arith.constant 0 : index
    %c0_1 = arith.constant 0 : index
    %3 = vector.load %arg9[%c0, %c0_1] : memref<1x128xf32, #tpu.memory_space<vmem>>, vector<1x128xf32>
    %c0_2 = arith.constant 0 : index
    %c0_3 = arith.constant 0 : index
    %4 = vector.load %arg10[%c0_2, %c0_3] : memref<1x128xf32, #tpu.memory_space<vmem>>, vector<1x128xf32>
    %5 = arith.index_cast %arg0 : i32 to index
    %c0_4 = arith.constant 0 : index
    %6 = vector.load %arg8[%5, %c0_4] : memref<8x512xf32, #tpu.memory_space<vmem>>, vector<1x512xf32>
    %c0_5 = arith.constant 0 : index
    %c0_6 = arith.constant 0 : index
    %7 = vector.load %arg3[%c0_5, %c0_6] : memref<128x512xf32, #tpu.memory_space<vmem>>, vector<128x512xf32>
    %cst = arith.constant dense<0.000000e+00> : vector<1x512xf32>
    %8 = tpu.matmul %3, %7, %cst {dimension_numbers = #tpu.dot_dimension_numbers<[1], [0], [0], [1], [0, 0, 1, 1], [], []>} : vector<1x128xf32>, vector<128x512xf32>, vector<1x512xf32> -> vector<1x512xf32>
    %9 = arith.addf %6, %8 : vector<1x512xf32>
    %10 = vector.extract_strided_slice %9 {offsets = [0, 0], sizes = [1, 128], strides = [1, 1]} : vector<1x512xf32> to vector<1x128xf32>
    %11 = arith.negf %10 : vector<1x128xf32>
    %12 = math.exp %11 : vector<1x128xf32>
    %cst_7 = arith.constant 1.000000e+00 : f32
    %13 = vector.broadcast %cst_7 : f32 to vector<1x128xf32>
    %14 = arith.addf %13, %12 : vector<1x128xf32>
    %15 = arith.divf %13, %14 : vector<1x128xf32>
    %16 = vector.extract_strided_slice %9 {offsets = [0, 128], sizes = [1, 128], strides = [1, 1]} : vector<1x512xf32> to vector<1x128xf32>
    %17 = arith.negf %16 : vector<1x128xf32>
    %18 = math.exp %17 : vector<1x128xf32>
    %cst_8 = arith.constant 1.000000e+00 : f32
    %19 = vector.broadcast %cst_8 : f32 to vector<1x128xf32>
    %20 = arith.addf %19, %18 : vector<1x128xf32>
    %21 = arith.divf %19, %20 : vector<1x128xf32>
    %22 = vector.extract_strided_slice %9 {offsets = [0, 256], sizes = [1, 128], strides = [1, 1]} : vector<1x512xf32> to vector<1x128xf32>
    %23 = math.tanh %22 : vector<1x128xf32>
    %24 = vector.extract_strided_slice %9 {offsets = [0, 384], sizes = [1, 128], strides = [1, 1]} : vector<1x512xf32> to vector<1x128xf32>
    %25 = arith.negf %24 : vector<1x128xf32>
    %26 = math.exp %25 : vector<1x128xf32>
    %cst_9 = arith.constant 1.000000e+00 : f32
    %27 = vector.broadcast %cst_9 : f32 to vector<1x128xf32>
    %28 = arith.addf %27, %26 : vector<1x128xf32>
    %29 = arith.divf %27, %28 : vector<1x128xf32>
    %30 = arith.mulf %21, %4 : vector<1x128xf32>
    %31 = arith.mulf %15, %23 : vector<1x128xf32>
    %32 = arith.addf %30, %31 : vector<1x128xf32>
    %33 = math.tanh %32 : vector<1x128xf32>
    %34 = arith.mulf %29, %33 : vector<1x128xf32>
    %c0_10 = arith.constant 0 : index
    %c0_11 = arith.constant 0 : index
    %35 = vector.load %arg9[%c0_10, %c0_11] : memref<1x128xf32, #tpu.memory_space<vmem>>, vector<1x128xf32>
    tpu.vector_store %arg9[%c0_10, %c0_11], %34 {strides = array<i32>} : memref<1x128xf32, #tpu.memory_space<vmem>>, vector<1x128xf32>,
    %c0_12 = arith.constant 0 : index
    %c0_13 = arith.constant 0 : index
    %36 = vector.load %arg10[%c0_12, %c0_13] : memref<1x128xf32, #tpu.memory_space<vmem>>, vector<1x128xf32>
    tpu.vector_store %arg10[%c0_12, %c0_13], %32 {strides = array<i32>} : memref<1x128xf32, #tpu.memory_space<vmem>>, vector<1x128xf32>,
    %c0_14 = arith.constant 0 : index
    %c0_15 = arith.constant 0 : index
    %c0_16 = arith.constant 0 : index
    %37 = vector.load %arg6[%c0_14, %c0_15, %c0_16] : memref<1x1x128xf32, #tpu.memory_space<vmem>>, vector<1x1x128xf32>
    %38 = vector.shape_cast %37 : vector<1x1x128xf32> to vector<1x128xf32>
    %39 = vector.shape_cast %34 : vector<1x128xf32> to vector<1x1x128xf32>
    tpu.vector_store %arg6[%c0_14, %c0_15, %c0_16], %39 {strides = array<i32>} : memref<1x1x128xf32, #tpu.memory_space<vmem>>, vector<1x1x128xf32>,
    %c7_i32 = arith.constant 7 : i32
    %40 = arith.cmpi eq, %arg0, %c7_i32 : i32
    %41 = arith.extui %40 : i1 to i32
    %c0_i32_17 = arith.constant 0 : i32
    %42 = arith.cmpi ne, %41, %c0_i32_17 : i32
    scf.if %42 {
      %c0_18 = arith.constant 0 : index
      %c0_19 = arith.constant 0 : index
      %43 = vector.load %arg7[%c0_18, %c0_19] : memref<2x128xf32, #tpu.memory_space<vmem>>, vector<1x128xf32>
      tpu.vector_store %arg7[%c0_18, %c0_19], %34 {strides = array<i32>} : memref<2x128xf32, #tpu.memory_space<vmem>>, vector<1x128xf32>,
      %c1 = arith.constant 1 : index
      %c0_20 = arith.constant 0 : index
      %44 = vector.load %arg7[%c1, %c0_20] : memref<2x128xf32, #tpu.memory_space<vmem>>, vector<1x128xf32>
      tpu.vector_store %arg7[%c1, %c0_20], %32 {strides = array<i32>} : memref<2x128xf32, #tpu.memory_space<vmem>>, vector<1x128xf32>,
    } else {
    }
    return
  }
  func.func @transform_0(%arg0: i32) -> (i32, i32) {
    %c0_i32 = arith.constant 0 : i32
    %c0_i32_0 = arith.constant 0 : i32
    %c0_i32_1 = arith.constant 0 : i32
    return %c0_i32, %c0_i32_0 : i32, i32
  }
  func.func @transform_1(%arg0: i32) -> (i32, i32) {
    %c0_i32 = arith.constant 0 : i32
    %c0_i32_0 = arith.constant 0 : i32
    %c0_i32_1 = arith.constant 0 : i32
    return %c0_i32, %c0_i32_0 : i32, i32
  }
  func.func @transform_2(%arg0: i32) -> (i32, i32) {
    %c0_i32 = arith.constant 0 : i32
    %c0_i32_0 = arith.constant 0 : i32
    %c0_i32_1 = arith.constant 0 : i32
    return %c0_i32, %c0_i32_0 : i32, i32
  }
  func.func @transform_3(%arg0: i32) -> (i32, i32) {
    %c0_i32 = arith.constant 0 : i32
    %c0_i32_0 = arith.constant 0 : i32
    %c0_i32_1 = arith.constant 0 : i32
    return %c0_i32, %c0_i32_0 : i32, i32
  }
  func.func @transform_4(%arg0: i32) -> (i32, i32) {
    %c0_i32 = arith.constant 0 : i32
    %c0_i32_0 = arith.constant 0 : i32
    %c0_i32_1 = arith.constant 0 : i32
    return %c0_i32, %c0_i32_0 : i32, i32
  }
  func.func @transform_5(%arg0: i32) -> (i32, i32, i32) {
    %c0_i32 = arith.constant 0 : i32
    %c0_i32_0 = arith.constant 0 : i32
    %c0_i32_1 = arith.constant 0 : i32
    return %arg0, %c0_i32, %c0_i32_0 : i32, i32, i32
  }
  func.func @transform_6(%arg0: i32) -> (i32, i32) {
    %c0_i32 = arith.constant 0 : i32
    %c0_i32_0 = arith.constant 0 : i32
    %c0_i32_1 = arith.constant 0 : i32
    return %c0_i32, %c0_i32_0 : i32, i32
  }
}

module attributes {stable_mosaic.version = 11 : i64} {
  func.func @_gather_rows_kernel(%arg0: i32, %arg1: memref<8xi32, #tpu.memory_space<smem>>, %arg2: memref<1x1x128xf32, #tpu.memory_space<vmem>>, %arg3: memref<1x1x128xf32, #tpu.memory_space<vmem>>) attributes {dimension_semantics = [#tpu.dimension_semantics<parallel>], iteration_bounds = array<i64: 8>, scalar_prefetch = 1 : i64, scratch_operands = 0 : i64, tpu.core_type = #tpu.core_type<tc>, window_params = [{transform_indices = @transform_0, window_bounds = array<i64: 1, 1, 128>}, {transform_indices = @transform_1, window_bounds = array<i64: 1, 1, 128>}]} {
    %c0 = arith.constant 0 : index
    %c0_0 = arith.constant 0 : index
    %c0_1 = arith.constant 0 : index
    %0 = vector.load %arg2[%c0, %c0_0, %c0_1] : memref<1x1x128xf32, #tpu.memory_space<vmem>>, vector<1x1x128xf32>
    %c0_2 = arith.constant 0 : index
    %c0_3 = arith.constant 0 : index
    %c0_4 = arith.constant 0 : index
    %1 = vector.load %arg3[%c0_2, %c0_3, %c0_4] : memref<1x1x128xf32, #tpu.memory_space<vmem>>, vector<1x1x128xf32>
    tpu.vector_store %arg3[%c0_2, %c0_3, %c0_4], %0 {strides = array<i32>} : memref<1x1x128xf32, #tpu.memory_space<vmem>>, vector<1x1x128xf32>,
    return
  }
  func.func @transform_0(%arg0: i32, %arg1: memref<8xi32, #tpu.memory_space<smem>>) -> (i32, i32, i32) {
    %0 = arith.index_cast %arg0 : i32 to index
    %1 = memref.load %arg1[%0] : memref<8xi32, #tpu.memory_space<smem>>
    %c0_i32 = arith.constant 0 : i32
    %c0_i32_0 = arith.constant 0 : i32
    %c0_i32_1 = arith.constant 0 : i32
    return %1, %c0_i32, %c0_i32_0 : i32, i32, i32
  }
  func.func @transform_1(%arg0: i32, %arg1: memref<8xi32, #tpu.memory_space<smem>>) -> (i32, i32, i32) {
    %c0_i32 = arith.constant 0 : i32
    %c0_i32_0 = arith.constant 0 : i32
    %c0_i32_1 = arith.constant 0 : i32
    return %arg0, %c0_i32, %c0_i32_0 : i32, i32, i32
  }
}

</mosaic_0001>

<llo_original>
// kernel: encoder_forward_sequence.2
$region0: #{encoder_forward_sequence.2}
  #allocation0 [shape = 'u32[]', space=smem, size = 0x4, offset = 0x4, fixed_abs, tag = 'smem constant byte address 0x4 - core index']
  #allocation1 [shape = 'u32[144,128]{1,0:T(1,128)}', space=vmem, size = 0x12000, scoped, tag = 'internal scratch']
  #allocation2 [shape = 's32[1]{0}', space=sflag, size = 0x4, scoped, tag = 'scoped memory for encoder_forward_sequence.2']
  #allocation3 [shape = 'u8[512]{0}', space=smem, size = 0x200, scoped, tag = 'prefetched SMEM operand 0']
  %s0 = inlined_call_operand.vmem [shape: s32[8], index: 0, kind: input, shape index: {}]
  %s1 = inlined_call_operand.hbm [shape: f32[1000,1,128], index: 1, kind: input, shape index: {}]
  %s2 = inlined_call_operand.vmem [shape: f32[8,1,128], index: 2, kind: output, shape index: {}]
  %s3 = sld [smem:[#allocation0]]
  $region41: #{encoder_forward_sequence.2} parent=0
    _
  %s5 = ssub.s32 1, %s3
  %s6 = scalar_select 0, %s5, %s3
  %s7 = sshll.u32 %s0, 4
  %s8 = int_to_ptr.vmem [resolvable:$true] %s7
  %10 = dma.vmem_to_smem %s8, 16, [#allocation3], [#allocation2]
  %11 = dma.done [#allocation2], 16
  %12 = sfence
  $region1: #{encoder_forward_sequence.2} parent=0
    #allocation4 [shape = 'u8[1024]{0}', space=vmem, size = 0x400, scoped, tag = 'input window, operand 1']
    #allocation5 [shape = 's32[2]{0}', space=sflag, size = 0x8, scoped, tag = 'scoped memory for encoder_forward_sequence.2']
    %13 = vsyncpa [#allocation5], 0
    %s14 = scalar_lea.sflag [#allocation5], 1
    %15 = vsyncpa %s14, 0
    loop: start=0, step=1, limit=10
    $region2: #{encoder_forward_sequence.2} parent=1 // loop_pre_header
      _
    $region3: #{encoder_forward_sequence.2} parent=1 // loop_header
      %s17 = sphi 0, %s21
      %p18 = scmp.ge.s32.totalorder %s17, 10
      %s29 = sphi 0, %s31
      %s32 = sphi 0, %s29
      %s33 = sphi 0, %s32
      %s49 = sphi 0, %s33
      %s55 = sphi 0, %s57
      %s58 = sphi 0, %s55
      %s59 = sphi 0, %s58
      %s75 = sphi 0, %s59
    $region4: #{encoder_forward_sequence.2} parent=1 // loop_header_branch
      %20 = sbr.rel (%p18) target = $region8
    $region5: #{encoder_forward_sequence.2} parent=1 // loop_body
      %s22 = ssub.s32 %s17, 1
      %s23 = ssub.s32 %s17, 2
      %s24 = sadd.s32 %s17, 1
      %s25 = sld [smem:[#allocation3 + %s17]]
      %s26 = sld [smem:[#allocation3 + %s24]]
      %s27 = ssub.s32 %s25, %s26
      %p28 = scmp.eq.s32.totalorder %s27, 0
      %s30 = sadd.s32 %s29, 1
      %s31 = scalar_select %p28, %s29, %s30
      %p34 = pneg %p28
      %p35 = scmp.eq.s32.totalorder %s17, 7
      %p36 = por %p34, %p35
      %p37 = scmp.ne.s32.totalorder %s29, %s32
      %p38 = scmp.eq.s32.totalorder %s17, 0
      %p39 = por %p37, %p38
      %p40 = scmp.ne.s32.totalorder %s29, %s32
      %p41 = scmp.eq.s32.totalorder %s22, 7
      %p42 = por %p40, %p41
      %p43 = scmp.ne.s32.totalorder %s32, %s33
      %p44 = scmp.eq.s32.totalorder %s22, 0
      %p45 = por %p43, %p44
      %p46 = scmp.ne.s32.totalorder %s32, %s33
      %p47 = scmp.eq.s32.totalorder %s23, 7
      %p48 = por %p46, %p47
      %p50 = scmp.ne.s32.totalorder %s33, %s49
      %p51 = scmp.eq.s32.totalorder %s23, 0
      %p52 = por %p50, %p51
      %s53 = ssub.s32 %s17, %s24
      %p54 = scmp.eq.s32.totalorder %s53, 0
      %s56 = sadd.s32 %s55, 1
      %s57 = scalar_select %p54, %s55, %s56
      %p60 = pneg %p54
      %p61 = scmp.eq.s32.totalorder %s17, 7
      %p62 = por %p60, %p61
      %p63 = scmp.ne.s32.totalorder %s55, %s58
      %p64 = scmp.eq.s32.totalorder %s17, 0
      %p65 = por %p63, %p64
      %p66 = scmp.ne.s32.totalorder %s55, %s58
      %p67 = scmp.eq.s32.totalorder %s22, 7
      %p68 = por %p66, %p67
      %p69 = scmp.ne.s32.totalorder %s58, %s59
      %p70 = scmp.eq.s32.totalorder %s22, 0
      %p71 = por %p69, %p70
      %p72 = scmp.ne.s32.totalorder %s58, %s59
      %p73 = scmp.eq.s32.totalorder %s23, 7
      %p74 = por %p72, %p73
      %p76 = scmp.ne.s32.totalorder %s59, %s75
      %p77 = scmp.eq.s32.totalorder %s23, 0
      %p78 = por %p76, %p77
      %p79 = scmp.le.s32.totalorder 1, %s17
      %p80 = scmp.lt.s32.totalorder %s17, 9
      %p81 = pnand %p79, %p80
      %p82 = pneg %p81
      // Predicated region
      $region9: #{encoder_forward_sequence.2} parent=5 // pred_check
        _
      $region10: #{encoder_forward_sequence.2} parent=5 // pred_check_branch
        %84 = sbr.rel (%p81) target = $region12
      $region11: #{encoder_forward_sequence.2} parent=5 // pred_region
        %s85 = ssub.s32 %s17, 1
      $region12: #{encoder_forward_sequence.2} parent=5 // pred_fallthru
        _
      %p86 = scmp.lt.s32.totalorder %s17, 8
      // Predicated region
      $region13: #{encoder_forward_sequence.2} parent=5 // pred_check
        %p87 = pneg %p86
      $region14: #{encoder_forward_sequence.2} parent=5 // pred_check_branch
        %89 = sbr.rel (%p87) target = $region16
      $region15: #{encoder_forward_sequence.2} parent=5 // pred_region
        // Predicated region
        $region17: #{encoder_forward_sequence.2} parent=15 // pred_check
          %p90 = pneg %p39
        $region18: #{encoder_forward_sequence.2} parent=15 // pred_check_branch
          %92 = sbr.rel (%p90) target = $region20
        $region19: #{encoder_forward_sequence.2} parent=15 // pred_region
          %s93 = sand.u32 %s29, 1
          %s94 = scalar_lea.sflag [#allocation5], %s93
          %s95 = sand.u32 %s29, 1
          %s96 = scalar_lea.vmem [#allocation4], %s95
          %s97 = sld [smem:[#allocation3 + %s17]]
          %s99 = ssub.s32 16, 16
          %100 = vsyncadd %s94, %s99
          %s101 = smul.addr %s97, 16
          %s102 = scalar_lea.hbm %s1, %s101
          %s104 = sshll.u32 %s96, 4
          %s105 = int_to_ptr.vmem [resolvable:$true] %s104
          %107 = dma.hbm_to_vmem [thread:$0]  %s102, 16, %s105, %s94
        $region20: #{encoder_forward_sequence.2} parent=15 // pred_fallthru
          _
      $region16: #{encoder_forward_sequence.2} parent=5 // pred_fallthru
        _
      %p108 = scmp.le.s32.totalorder 1, %s17
      %p109 = scmp.lt.s32.totalorder %s17, 9
      %p110 = pnand %p108, %p109
      %p111 = pneg %p110
      // Predicated region
      $region21: #{encoder_forward_sequence.2} parent=5 // pred_check
        _
      $region22: #{encoder_forward_sequence.2} parent=5 // pred_check_branch
        %113 = sbr.rel (%p110) target = $region24
      $region23: #{encoder_forward_sequence.2} parent=5 // pred_region
        %s114 = ssub.s32 %s17, 1
        %s115 = sand.u32 %s32, 1
        %s116 = scalar_lea.sflag [#allocation5], %s115
        %s117 = sand.u32 %s32, 1
        %s118 = scalar_lea.vmem [#allocation4], %s117
        // Predicated region
        $region25: #{encoder_forward_sequence.2} parent=23 // pred_check
          %p119 = pneg %p45
        $region26: #{encoder_forward_sequence.2} parent=23 // pred_check_branch
          %121 = sbr.rel (%p119) target = $region28
        $region27: #{encoder_forward_sequence.2} parent=23 // pred_region
          %122 = dma.done %s116, 16
        $region28: #{encoder_forward_sequence.2} parent=23 // pred_fallthru
          _
        %s123 = sand.u32 %s32, 1
        %s124 = scalar_lea.sflag [#allocation5], %s123
        %s125 = sand.u32 %s32, 1
        %s126 = scalar_lea.vmem [#allocation4], %s125
        %p127 = pneg %p45
        %p128 = pneg %p42
        %p129 = pneg %p71
        %p130 = pneg %p68
        %p131 = scmp.lt.s32.totalorder %s22, 7
        %s132 = scalar_select %p131, %s22, 7
        %s133 = scalar_lea.vmem %s2, %s132
        %s134 = sld [smem:[#allocation3 + %s22]]
        %p135 = scmp.lt.s32.totalorder %s22, 7
        %s136 = scalar_select %p135, %s22, 7
        %s137 = scalar_lea.vmem %s2, %s136
        %v138 = vld [vmem:[%s118] sm:$0x1]
        %139 = vst [vmem:[%s137] sm:$0x1] %v138
        %p140 = scmp.lt.s32.totalorder %s22, 7
        %s141 = scalar_select %p140, %s22, 7
        %s142 = scalar_lea.vmem %s2, %s141
        // Predicated region
        $region29: #{encoder_forward_sequence.2} parent=23 // pred_check
          %p143 = pneg %p68
        $region30: #{encoder_forward_sequence.2} parent=23 // pred_check_branch
          %145 = sbr.rel (%p143) target = $region32
        $region31: #{encoder_forward_sequence.2} parent=23 // pred_region
          _
        $region32: #{encoder_forward_sequence.2} parent=23 // pred_fallthru
          _
      $region24: #{encoder_forward_sequence.2} parent=5 // pred_fallthru
        _
      %p146 = scmp.le.s32.totalorder 2, %s17
      // Predicated region
      $region33: #{encoder_forward_sequence.2} parent=5 // pred_check
        %p147 = pneg %p146
      $region34: #{encoder_forward_sequence.2} parent=5 // pred_check_branch
        %149 = sbr.rel (%p147) target = $region36
      $region35: #{encoder_forward_sequence.2} parent=5 // pred_region
        %s150 = ssub.s32 %s17, 2
        // Predicated region
        $region37: #{encoder_forward_sequence.2} parent=35 // pred_check
          %p151 = pneg %p74
        $region38: #{encoder_forward_sequence.2} parent=35 // pred_check_branch
          %153 = sbr.rel (%p151) target = $region40
        $region39: #{encoder_forward_sequence.2} parent=35 // pred_region
          %p154 = scmp.lt.s32.totalorder %s23, 7
          %s155 = scalar_select %p154, %s23, 7
          %s156 = scalar_lea.vmem %s2, %s155
        $region40: #{encoder_forward_sequence.2} parent=35 // pred_fallthru
          _
      $region36: #{encoder_forward_sequence.2} parent=5 // pred_fallthru
        _
    $region6: #{encoder_forward_sequence.2} parent=1 // loop_footer
      %s21 = sadd.s32 1, %s17
    $region7: #{encoder_forward_sequence.2} parent=1 // loop_footer_branch
      %16 = sbr.rel target = $region3
    $region8: #{encoder_forward_sequence.2} parent=1 // loop_exit
      _
    %157 = vsyncpa [#allocation5], 1
    %s158 = scalar_lea.sflag [#allocation5], 1
    %159 = vsyncpa %s158, 1

// kernel: encoder_forward_sequence.3
$region0: #{encoder_forward_sequence.3}
  #allocation0 [shape = 'u32[]', space=smem, size = 0x4, offset = 0x4, fixed_abs, tag = 'smem constant byte address 0x4 - core index']
  #allocation1 [shape = 'u32[144,128]{1,0:T(1,128)}', space=vmem, size = 0x12000, scoped, tag = 'internal scratch']
  #allocation2 [shape = 'f32[8,512]{1,0:T(8,128)}', space=vmem, size = 0x4000, scoped, tag = 'scratch operand']
  #allocation3 [shape = 'f32[1,128]{1,0:T(1,128)}', space=vmem, size = 0x200, scoped, tag = 'scratch operand']
  #allocation4 [shape = 'f32[1,128]{1,0:T(1,128)}', space=vmem, size = 0x200, scoped, tag = 'scratch operand']
  %s0 = inlined_call_operand.vmem [shape: f32[8,128], index: 0, kind: input, shape index: {}]
  %s1 = inlined_call_operand.vmem [shape: f32[128,512], index: 1, kind: input, shape index: {}]
  %s2 = inlined_call_operand.vmem [shape: f32[128,512], index: 2, kind: input, shape index: {}]
  %s3 = inlined_call_operand.hbm [shape: f32[1,512], index: 3, kind: input, shape index: {}]
  %s4 = inlined_call_operand.vmem [shape: f32[2,128], index: 4, kind: input, shape index: {}]
  %s5 = inlined_call_operand.hbm [shape: f32[8,1,128], index: 5, kind: output, shape index: {0}]
  %s6 = inlined_call_operand.vmem [shape: f32[2,128], index: 6, kind: output, shape index: {1}]
  %7 = xla_tuple %s5, %s6
  %s8 = sld [smem:[#allocation0]]
  $region73: #{encoder_forward_sequence.3} parent=0
    _
  %s10 = ssub.s32 1, %s8
  %s11 = scalar_select 0, %s10, %s8
  $region1: #{encoder_forward_sequence.3} parent=0
    #allocation5 [shape = 'u8[2048]{0}', space=vmem, size = 0x800, scoped, tag = 'input window, operand 3, single buffered']
    #allocation6 [shape = 's32[2]{0}', space=sflag, size = 0x8, scoped, tag = 'scoped memory for encoder_forward_sequence.3']
    #allocation7 [shape = 's32[2]{0}', space=sflag, size = 0x8, scoped, tag = 'scoped memory for encoder_forward_sequence.3']
    #allocation8 [shape = 'u8[1024]{0}', space=vmem, size = 0x400, scoped, tag = 'output window, operand 0']
    %12 = vsyncpa [#allocation6], 0
    %13 = vsyncpa [#allocation7], 0
    %s14 = scalar_lea.sflag [#allocation7], 1
    %15 = vsyncpa %s14, 0
    loop: start=0, step=1, limit=10
    $region2: #{encoder_forward_sequence.3} parent=1 // loop_pre_header
      _
    $region3: #{encoder_forward_sequence.3} parent=1 // loop_header
      %s17 = sphi 0, %s21
      %p18 = scmp.ge.s32.totalorder %s17, 10
      %s25 = sphi 0, %s25
      %s27 = sphi 0, %s25
      %s28 = sphi 0, %s27
      %s42 = sphi 0, %s28
      %s46 = sphi 0, %s46
      %s48 = sphi 0, %s46
      %s49 = sphi 0, %s48
      %s63 = sphi 0, %s49
      %s67 = sphi 0, %s67
      %s69 = sphi 0, %s67
      %s70 = sphi 0, %s69
      %s84 = sphi 0, %s70
      %s88 = sphi 0, %s88
      %s90 = sphi 0, %s88
      %s91 = sphi 0, %s90
      %s105 = sphi 0, %s91
      %s109 = sphi 0, %s109
      %s111 = sphi 0, %s109
      %s112 = sphi 0, %s111
      %s126 = sphi 0, %s112
      %s132 = sphi 0, %s134
      %s135 = sphi 0, %s132
      %s136 = sphi 0, %s135
      %s152 = sphi 0, %s136
      %s156 = sphi 0, %s156
      %s158 = sphi 0, %s156
      %s159 = sphi 0, %s158
      %s173 = sphi 0, %s159
    $region4: #{encoder_forward_sequence.3} parent=1 // loop_header_branch
      %20 = sbr.rel (%p18) target = $region8
    $region5: #{encoder_forward_sequence.3} parent=1 // loop_body
      %s22 = ssub.s32 %s17, 1
      %s23 = ssub.s32 %s17, 2
      %s24 = sadd.s32 %s17, 1
      %s26 = sadd.s32 %s25, 1
      %p29 = scmp.eq.s32.totalorder %s17, 7
      %p30 = scmp.ne.s32.totalorder %s25, %s27
      %p31 = scmp.eq.s32.totalorder %s17, 0
      %p32 = por %p30, %p31
      %p33 = scmp.ne.s32.totalorder %s25, %s27
      %p34 = scmp.eq.s32.totalorder %s22, 7
      %p35 = por %p33, %p34
      %p36 = scmp.ne.s32.totalorder %s27, %s28
      %p37 = scmp.eq.s32.totalorder %s22, 0
      %p38 = por %p36, %p37
      %p39 = scmp.ne.s32.totalorder %s27, %s28
      %p40 = scmp.eq.s32.totalorder %s23, 7
      %p41 = por %p39, %p40
      %p43 = scmp.ne.s32.totalorder %s28, %s42
      %p44 = scmp.eq.s32.totalorder %s23, 0
      %p45 = por %p43, %p44
      %s47 = sadd.s32 %s46, 1
      %p50 = scmp.eq.s32.totalorder %s17, 7
      %p51 = scmp.ne.s32.totalorder %s46, %s48
      %p52 = scmp.eq.s32.totalorder %s17, 0
      %p53 = por %p51, %p52
      %p54 = scmp.ne.s32.totalorder %s46, %s48
      %p55 = scmp.eq.s32.totalorder %s22, 7
      %p56 = por %p54, %p55
      %p57 = scmp.ne.s32.totalorder %s48, %s49
      %p58 = scmp.eq.s32.totalorder %s22, 0
      %p59 = por %p57, %p58
      %p60 = scmp.ne.s32.totalorder %s48, %s49
      %p61 = scmp.eq.s32.totalorder %s23, 7
      %p62 = por %p60, %p61
      %p64 = scmp.ne.s32.totalorder %s49, %s63
      %p65 = scmp.eq.s32.totalorder %s23, 0
      %p66 = por %p64, %p65
      %s68 = sadd.s32 %s67, 1
      %p71 = scmp.eq.s32.totalorder %s17, 7
      %p72 = scmp.ne.s32.totalorder %s67, %s69
      %p73 = scmp.eq.s32.totalorder %s17, 0
      %p74 = por %p72, %p73
      %p75 = scmp.ne.s32.totalorder %s67, %s69
      %p76 = scmp.eq.s32.totalorder %s22, 7
      %p77 = por %p75, %p76
      %p78 = scmp.ne.s32.totalorder %s69, %s70
      %p79 = scmp.eq.s32.totalorder %s22, 0
      %p80 = por %p78, %p79
      %p81 = scmp.ne.s32.totalorder %s69, %s70
      %p82 = scmp.eq.s32.totalorder %s23, 7
      %p83 = por %p81, %p82
      %p85 = scmp.ne.s32.totalorder %s70, %s84
      %p86 = scmp.eq.s32.totalorder %s23, 0
      %p87 = por %p85, %p86
      %s89 = sadd.s32 %s88, 1
      %p92 = scmp.eq.s32.totalorder %s17, 7
      %p93 = scmp.ne.s32.totalorder %s88, %s90
      %p94 = scmp.eq.s32.totalorder %s17, 0
      %p95 = por %p93, %p94
      %p96 = scmp.ne.s32.totalorder %s88, %s90
      %p97 = scmp.eq.s32.totalorder %s22, 7
      %p98 = por %p96, %p97
      %p99 = scmp.ne.s32.totalorder %s90, %s91
      %p100 = scmp.eq.s32.totalorder %s22, 0
      %p101 = por %p99, %p100
      %p102 = scmp.ne.s32.totalorder %s90, %s91
      %p103 = scmp.eq.s32.totalorder %s23, 7
      %p104 = por %p102, %p103
      %p106 = scmp.ne.s32.totalorder %s91, %s105
      %p107 = scmp.eq.s32.totalorder %s23, 0
      %p108 = por %p106, %p107
      %s110 = sadd.s32 %s109, 1
      %p113 = scmp.eq.s32.totalorder %s17, 7
      %p114 = scmp.ne.s32.totalorder %s109, %s111
      %p115 = scmp.eq.s32.totalorder %s17, 0
      %p116 = por %p114, %p115
      %p117 = scmp.ne.s32.totalorder %s109, %s111
      %p118 = scmp.eq.s32.totalorder %s22, 7
      %p119 = por %p117, %p118
      %p120 = scmp.ne.s32.totalorder %s111, %s112
      %p121 = scmp.eq.s32.totalorder %s22, 0
      %p122 = por %p120, %p121
      %p123 = scmp.ne.s32.totalorder %s111, %s112
      %p124 = scmp.eq.s32.totalorder %s23, 7
      %p125 = por %p123, %p124
      %p127 = scmp.ne.s32.totalorder %s112, %s126
      %p128 = scmp.eq.s32.totalorder %s23, 0
      %p129 = por %p127, %p128
      %s130 = ssub.s32 %s17, %s24
      %p131 = scmp.eq.s32.totalorder %s130, 0
      %s133 = sadd.s32 %s132, 1
      %s134 = scalar_select %p131, %s132, %s133
      %p137 = pneg %p131
      %p138 = scmp.eq.s32.totalorder %s17, 7
      %p139 = por %p137, %p138
      %p140 = scmp.ne.s32.totalorder %s132, %s135
      %p141 = scmp.eq.s32.totalorder %s17, 0
      %p142 = por %p140, %p141
      %p143 = scmp.ne.s32.totalorder %s132, %s135
      %p144 = scmp.eq.s32.totalorder %s22, 7
      %p145 = por %p143, %p144
      %p146 = scmp.ne.s32.totalorder %s135, %s136
      %p147 = scmp.eq.s32.totalorder %s22, 0
      %p148 = por %p146, %p147
      %p149 = scmp.ne.s32.totalorder %s135, %s136
      %p150 = scmp.eq.s32.totalorder %s23, 7
      %p151 = por %p149, %p150
      %p153 = scmp.ne.s32.totalorder %s136, %s152
      %p154 = scmp.eq.s32.totalorder %s23, 0
      %p155 = por %p153, %p154
      %s157 = sadd.s32 %s156, 1
      %p160 = scmp.eq.s32.totalorder %s17, 7
      %p161 = scmp.ne.s32.totalorder %s156, %s158
      %p162 = scmp.eq.s32.totalorder %s17, 0
      %p163 = por %p161, %p162
      %p164 = scmp.ne.s32.totalorder %s156, %s158
      %p165 = scmp.eq.s32.totalorder %s22, 7
      %p166 = por %p164, %p165
      %p167 = scmp.ne.s32.totalorder %s158, %s159
      %p168 = scmp.eq.s32.totalorder %s22, 0
      %p169 = por %p167, %p168
      %p170 = scmp.ne.s32.totalorder %s158, %s159
      %p171 = scmp.eq.s32.totalorder %s23, 7
      %p172 = por %p170, %p171
      %p174 = scmp.ne.s32.totalorder %s159, %s173
      %p175 = scmp.eq.s32.totalorder %s23, 0
      %p176 = por %p174, %p175
      %p177 = scmp.le.s32.totalorder 1, %s17
      %p178 = scmp.lt.s32.totalorder %s17, 9
      %p179 = pnand %p177, %p178
      %p180 = pneg %p179
      // Predicated region
      $region9: #{encoder_forward_sequence.3} parent=5 // pred_check
        _
      $region10: #{encoder_forward_sequence.3} parent=5 // pred_check_branch
        %182 = sbr.rel (%p179) target = $region12
      $region11: #{encoder_forward_sequence.3} parent=5 // pred_region
        %s183 = ssub.s32 %s17, 1
        // Predicated region
        $region13: #{encoder_forward_sequence.3} parent=11 // pred_check
          %p184 = pneg %p38
        $region14: #{encoder_forward_sequence.3} parent=11 // pred_check_branch
          %186 = sbr.rel (%p184) target = $region16
        $region15: #{encoder_forward_sequence.3} parent=11 // pred_region
          _
        $region16: #{encoder_forward_sequence.3} parent=11 // pred_fallthru
          _
        // Predicated region
        $region17: #{encoder_forward_sequence.3} parent=11 // pred_check
          %p187 = pneg %p59
        $region18: #{encoder_forward_sequence.3} parent=11 // pred_check_branch
          %189 = sbr.rel (%p187) target = $region20
        $region19: #{encoder_forward_sequence.3} parent=11 // pred_region
          _
        $region20: #{encoder_forward_sequence.3} parent=11 // pred_fallthru
          _
        // Predicated region
        $region21: #{encoder_forward_sequence.3} parent=11 // pred_check
          %p190 = pneg %p80
        $region22: #{encoder_forward_sequence.3} parent=11 // pred_check_branch
          %192 = sbr.rel (%p190) target = $region24
        $region23: #{encoder_forward_sequence.3} parent=11 // pred_region
          _
        $region24: #{encoder_forward_sequence.3} parent=11 // pred_fallthru
          _
        // Predicated region
        $region25: #{encoder_forward_sequence.3} parent=11 // pred_check
          %p193 = pneg %p101
        $region26: #{encoder_forward_sequence.3} parent=11 // pred_check_branch
          %195 = sbr.rel (%p193) target = $region28
        $region27: #{encoder_forward_sequence.3} parent=11 // pred_region
          %s197 = ssub.s32 64, 64
          %198 = vsyncadd [#allocation6], %s197
          %s200 = sshll.u32 [#allocation5], 4
          %s201 = int_to_ptr.vmem [resolvable:$true] %s200
          %203 = dma.hbm_to_vmem [thread:$0]  %s3, 64, %s201, [#allocation6]
        $region28: #{encoder_forward_sequence.3} parent=11 // pred_fallthru
          _
        // Predicated region
        $region29: #{encoder_forward_sequence.3} parent=11 // pred_check
          %p204 = pneg %p122
        $region30: #{encoder_forward_sequence.3} parent=11 // pred_check_branch
          %206 = sbr.rel (%p204) target = $region32
        $region31: #{encoder_forward_sequence.3} parent=11 // pred_region
          _
        $region32: #{encoder_forward_sequence.3} parent=11 // pred_fallthru
          _
      $region12: #{encoder_forward_sequence.3} parent=5 // pred_fallthru
        _
      %p207 = scmp.lt.s32.totalorder %s17, 8
      // Predicated region
      $region33: #{encoder_forward_sequence.3} parent=5 // pred_check
        %p208 = pneg %p207
      $region34: #{encoder_forward_sequence.3} parent=5 // pred_check_branch
        %210 = sbr.rel (%p208) target = $region36
      $region35: #{encoder_forward_sequence.3} parent=5 // pred_region
        _
      $region36: #{encoder_forward_sequence.3} parent=5 // pred_fallthru
        _
      %p211 = scmp.le.s32.totalorder 1, %s17
      %p212 = scmp.lt.s32.totalorder %s17, 9
      %p213 = pnand %p211, %p212
      %p214 = pneg %p213
      // Predicated region
      $region37: #{encoder_forward_sequence.3} parent=5 // pred_check
        _
      $region38: #{encoder_forward_sequence.3} parent=5 // pred_check_branch
        %216 = sbr.rel (%p213) target = $region40
      $region39: #{encoder_forward_sequence.3} parent=5 // pred_region
        %s217 = ssub.s32 %s17, 1
        // Predicated region
        $region41: #{encoder_forward_sequence.3} parent=39 // pred_check
          %p218 = pneg %p101
        $region42: #{encoder_forward_sequence.3} parent=39 // pred_check_branch
          %220 = sbr.rel (%p218) target = $region44
        $region43: #{encoder_forward_sequence.3} parent=39 // pred_region
          %221 = dma.done [#allocation6], 64
        $region44: #{encoder_forward_sequence.3} parent=39 // pred_fallthru
          _
        %p222 = pneg %p38
        %p223 = pneg %p35
        %p224 = pneg %p59
        %p225 = pneg %p56
        %p226 = pneg %p80
        %p227 = pneg %p77
        %p228 = pneg %p101
        %p229 = pneg %p98
        %p230 = pneg %p122
        %p231 = pneg %p119
        %p232 = pneg %p148
        %p233 = pneg %p145
        %s234 = sand.u32 %s135, 1
        %s235 = scalar_lea.sflag [#allocation7], %s234
        %s236 = sand.u32 %s135, 1
        %s237 = scalar_lea.vmem [#allocation8], %s236
        %p238 = pneg %p169
        %p239 = pneg %p166
        %p240 = scmp.eq.s32.totalorder %s22, 0
        // Predicated region
        $region45: #{encoder_forward_sequence.3} parent=39 // pred_check
          %p241 = pneg %p240
        $region46: #{encoder_forward_sequence.3} parent=39 // pred_check_branch
          %243 = sbr.rel (%p241) target = $region48
        $region47: #{encoder_forward_sequence.3} parent=39 // pred_region
          %v244 = vld [vmem:[%s0] sm:$0xff]
          %v245 = vld [vmem:[%s1] sm:$0xff]
          %v246 = vld [vmem:[%s1 + $0x8] sm:$0xff]
          %v247 = vld [vmem:[%s1 + $0x10] sm:$0xff]
          %v248 = vld [vmem:[%s1 + $0x18] sm:$0xff]
          %v249 = vld [vmem:[%s1 + $0x20] sm:$0xff]
          %v250 = vld [vmem:[%s1 + $0x28] sm:$0xff]
          %v251 = vld [vmem:[%s1 + $0x30] sm:$0xff]
          %v252 = vld [vmem:[%s1 + $0x38] sm:$0xff]
          %v253 = vld [vmem:[%s1 + $0x40] sm:$0xff]
          %v254 = vld [vmem:[%s1 + $0x48] sm:$0xff]
          %v255 = vld [vmem:[%s1 + $0x50] sm:$0xff]
          %v256 = vld [vmem:[%s1 + $0x58] sm:$0xff]
          %v257 = vld [vmem:[%s1 + $0x60] sm:$0xff]
          %v258 = vld [vmem:[%s1 + $0x68] sm:$0xff]
          %v259 = vld [vmem:[%s1 + $0x70] sm:$0xff]
          %v260 = vld [vmem:[%s1 + $0x78] sm:$0xff]
          %v261 = vld [vmem:[%s1 + $0x80] sm:$0xff]
          %v262 = vld [vmem:[%s1 + $0x88] sm:$0xff]
          %v263 = vld [vmem:[%s1 + $0x90] sm:$0xff]
          %v264 = vld [vmem:[%s1 + $0x98] sm:$0xff]
          %v265 = vld [vmem:[%s1 + $0xa0] sm:$0xff]
          %v266 = vld [vmem:[%s1 + $0xa8] sm:$0xff]
          %v267 = vld [vmem:[%s1 + $0xb0] sm:$0xff]
          %v268 = vld [vmem:[%s1 + $0xb8] sm:$0xff]
          %v269 = vld [vmem:[%s1 + $0xc0] sm:$0xff]
          %v270 = vld [vmem:[%s1 + $0xc8] sm:$0xff]
          %v271 = vld [vmem:[%s1 + $0xd0] sm:$0xff]
          %v272 = vld [vmem:[%s1 + $0xd8] sm:$0xff]
          %v273 = vld [vmem:[%s1 + $0xe0] sm:$0xff]
          %v274 = vld [vmem:[%s1 + $0xe8] sm:$0xff]
          %v275 = vld [vmem:[%s1 + $0xf0] sm:$0xff]
          %v276 = vld [vmem:[%s1 + $0xf8] sm:$0xff]
          %v277 = vld [vmem:[%s1 + $0x100] sm:$0xff]
          %v278 = vld [vmem:[%s1 + $0x108] sm:$0xff]
          %v279 = vld [vmem:[%s1 + $0x110] sm:$0xff]
          %v280 = vld [vmem:[%s1 + $0x118] sm:$0xff]
          %v281 = vld [vmem:[%s1 + $0x120] sm:$0xff]
          %v282 = vld [vmem:[%s1 + $0x128] sm:$0xff]
          %v283 = vld [vmem:[%s1 + $0x130] sm:$0xff]
          %v284 = vld [vmem:[%s1 + $0x138] sm:$0xff]
          %v285 = vld [vmem:[%s1 + $0x140] sm:$0xff]
          %v286 = vld [vmem:[%s1 + $0x148] sm:$0xff]
          %v287 = vld [vmem:[%s1 + $0x150] sm:$0xff]
          %v288 = vld [vmem:[%s1 + $0x158] sm:$0xff]
          %v289 = vld [vmem:[%s1 + $0x160] sm:$0xff]
          %v290 = vld [vmem:[%s1 + $0x168] sm:$0xff]
          %v291 = vld [vmem:[%s1 + $0x170] sm:$0xff]
          %v292 = vld [vmem:[%s1 + $0x178] sm:$0xff]
          %v293 = vld [vmem:[%s1 + $0x180] sm:$0xff]
          %v294 = vld [vmem:[%s1 + $0x188] sm:$0xff]
          %v295 = vld [vmem:[%s1 + $0x190] sm:$0xff]
          %v296 = vld [vmem:[%s1 + $0x198] sm:$0xff]
          %v297 = vld [vmem:[%s1 + $0x1a0] sm:$0xff]
          %v298 = vld [vmem:[%s1 + $0x1a8] sm:$0xff]
          %v299 = vld [vmem:[%s1 + $0x1b0] sm:$0xff]
          %v300 = vld [vmem:[%s1 + $0x1b8] sm:$0xff]
          %v301 = vld [vmem:[%s1 + $0x1c0] sm:$0xff]
          %v302 = vld [vmem:[%s1 + $0x1c8] sm:$0xff]
          %v303 = vld [vmem:[%s1 + $0x1d0] sm:$0xff]
          %v304 = vld [vmem:[%s1 + $0x1d8] sm:$0xff]
          %v305 = vld [vmem:[%s1 + $0x1e0] sm:$0xff]
          %v306 = vld [vmem:[%s1 + $0x1e8] sm:$0xff]
          %v307 = vld [vmem:[%s1 + $0x1f0] sm:$0xff]
          %v308 = vld [vmem:[%s1 + $0x1f8] sm:$0xff]
          %v309 = vld [vmem:[#allocation5] sm:$0xf]
          %v311 = vlaneseq
          %v312 = vshrl.u32 %v311, 7
          %v313 = vsub.s32 0, %v312
          %v314 = vrot.slane %v309, %v313
          %v315 = vlaneseq
          %v316 = vshrl.u32 %v315, 7
          %v317 = vsub.s32 1, %v316
          %v318 = vrot.slane %v309, %v317
          %v319 = vlaneseq
          %v320 = vshrl.u32 %v319, 7
          %v321 = vsub.s32 2, %v320
          %v322 = vrot.slane %v309, %v321
          %v323 = vlaneseq
          %v324 = vshrl.u32 %v323, 7
          %v325 = vsub.s32 3, %v324
          %v326 = vrot.slane %v309, %v325
          %331 = vmatprep.subr.mxu0 %v246
          %332 = vmatpush1.msra.mxu0 %v245
          %333 = vmatprep.subr.mxu0 %v250
          %334 = vmatpush1.msra.mxu0 %v249
          %335 = vmatprep.subr.mxu0 %v254
          %336 = vmatpush1.msra.mxu0 %v253
          %337 = vmatprep.subr.mxu0 %v258
          %338 = vmatpush1.msra.mxu0 %v257
          %339 = vmatprep.subr.mxu0 %v262
          %340 = vmatpush1.msra.mxu0 %v261
          %341 = vmatprep.subr.mxu0 %v266
          %342 = vmatpush1.msra.mxu0 %v265
          %343 = vmatprep.subr.mxu0 %v270
          %344 = vmatpush1.msra.mxu0 %v269
          %345 = vmatprep.subr.mxu0 %v274
          %346 = vmatpush1.msra.mxu0 %v273
          %347 = vmatprep.subr.mxu0 %v278
          %348 = vmatpush1.msra.mxu0 %v277
          %349 = vmatprep.subr.mxu0 %v282
          %350 = vmatpush1.msra.mxu0 %v281
          %351 = vmatprep.subr.mxu0 %v286
          %352 = vmatpush1.msra.mxu0 %v285
          %353 = vmatprep.subr.mxu0 %v290
          %354 = vmatpush1.msra.mxu0 %v289
          %355 = vmatprep.subr.mxu0 %v294
          %356 = vmatpush1.msra.mxu0 %v293
          %357 = vmatprep.subr.mxu0 %v298
          %358 = vmatpush1.msra.mxu0 %v297
          %359 = vmatprep.subr.mxu0 %v302
          %360 = vmatpush1.msra.mxu0 %v301
          %361 = vmatprep.subr.mxu0 %v306
          %362 = vmatpush1.msra.mxu0 %v305
          %363 = vmatprep.subr.mxu0 0.0
          %364 = vmatpush1.msra.mxu0 0.0
          %365 = vmatprep.subr.mxu0 0.0
          %366 = vmatpush1.msra.mxu0 0.0
          %367 = vmatprep.subr.mxu0 0.0
          %368 = vmatpush1.msra.mxu0 0.0
          %369 = vmatprep.subr.mxu0 0.0
          %370 = vmatpush1.msra.mxu0 0.0
          %371 = vmatprep.subr.mxu0 0.0
          %372 = vmatpush1.msra.mxu0 0.0
          %373 = vmatprep.subr.mxu0 0.0
          %374 = vmatpush1.msra.mxu0 0.0
          %375 = vmatprep.subr.mxu0 0.0
          %376 = vmatpush1.msra.mxu0 0.0
          %377 = vmatprep.subr.mxu0 0.0
          %378 = vmatpush1.msra.mxu0 0.0
          %379 = vmatprep.subr.mxu0 0.0
          %380 = vmatpush1.msra.mxu0 0.0
          %381 = vmatprep.subr.mxu0 0.0
          %382 = vmatpush1.msra.mxu0 0.0
          %383 = vmatprep.subr.mxu0 0.0
          %384 = vmatpush1.msra.mxu0 0.0
          %385 = vmatprep.subr.mxu0 0.0
          %386 = vmatpush1.msra.mxu0 0.0
          %387 = vmatprep.subr.mxu0 0.0
          %388 = vmatpush1.msra.mxu0 0.0
          %389 = vmatprep.subr.mxu0 0.0
          %390 = vmatpush1.msra.mxu0 0.0
          %391 = vmatprep.subr.mxu0 0.0
          %392 = vmatpush1.msra.mxu0 0.0
          %393 = vmatprep.subr.mxu0 0.0
          %394 = vmatpush1.msra.mxu0 0.0
          %395 = vmatprep.mubr.f32.mxu0 0.0
          %396 = vmatmul.mubr.f32.gmra.mrb[0].mxu0 %v244
          %v397 = vpop.f32.mrb[0].mxu0
          %v398 = vadd.f32 %v314, %v397
          %v399 = vpop.f32.mrb[0].mxu0
          %v400 = vadd.f32 %v318, %v399
          %401 = vdwg.mxu0
          %402 = vmatprep.subr.mxu0 %v248
          %403 = vmatpush1.msra.mxu0 %v247
          %404 = vmatprep.subr.mxu0 %v252
          %405 = vmatpush1.msra.mxu0 %v251
          %406 = vmatprep.subr.mxu0 %v256
          %407 = vmatpush1.msra.mxu0 %v255
          %408 = vmatprep.subr.mxu0 %v260
          %409 = vmatpush1.msra.mxu0 %v259
          %410 = vmatprep.subr.mxu0 %v264
          %411 = vmatpush1.msra.mxu0 %v263
          %412 = vmatprep.subr.mxu0 %v268
          %413 = vmatpush1.msra.mxu0 %v267
          %414 = vmatprep.subr.mxu0 %v272
          %415 = vmatpush1.msra.mxu0 %v271
          %416 = vmatprep.subr.mxu0 %v276
          %417 = vmatpush1.msra.mxu0 %v275
          %418 = vmatprep.subr.mxu0 %v280
          %419 = vmatpush1.msra.mxu0 %v279
          %420 = vmatprep.subr.mxu0 %v284
          %421 = vmatpush1.msra.mxu0 %v283
          %422 = vmatprep.subr.mxu0 %v288
          %423 = vmatpush1.msra.mxu0 %v287
          %424 = vmatprep.subr.mxu0 %v292
          %425 = vmatpush1.msra.mxu0 %v291
          %426 = vmatprep.subr.mxu0 %v296
          %427 = vmatpush1.msra.mxu0 %v295
          %428 = vmatprep.subr.mxu0 %v300
          %429 = vmatpush1.msra.mxu0 %v299
          %430 = vmatprep.subr.mxu0 %v304
          %431 = vmatpush1.msra.mxu0 %v303
          %432 = vmatprep.subr.mxu0 %v308
          %433 = vmatpush1.msra.mxu0 %v307
          %434 = vmatprep.subr.mxu0 0.0
          %435 = vmatpush1.msra.mxu0 0.0
          %436 = vmatprep.subr.mxu0 0.0
          %437 = vmatpush1.msra.mxu0 0.0
          %438 = vmatprep.subr.mxu0 0.0
          %439 = vmatpush1.msra.mxu0 0.0
          %440 = vmatprep.subr.mxu0 0.0
          %441 = vmatpush1.msra.mxu0 0.0
          %442 = vmatprep.subr.mxu0 0.0
          %443 = vmatpush1.msra.mxu0 0.0
          %444 = vmatprep.subr.mxu0 0.0
          %445 = vmatpush1.msra.mxu0 0.0
          %446 = vmatprep.subr.mxu0 0.0
          %447 = vmatpush1.msra.mxu0 0.0
          %448 = vmatprep.subr.mxu0 0.0
          %449 = vmatpush1.msra.mxu0 0.0
          %450 = vmatprep.subr.mxu0 0.0
          %451 = vmatpush1.msra.mxu0 0.0
          %452 = vmatprep.subr.mxu0 0.0
          %453 = vmatpush1.msra.mxu0 0.0
          %454 = vmatprep.subr.mxu0 0.0
          %455 = vmatpush1.msra.mxu0 0.0
          %456 = vmatprep.subr.mxu0 0.0
          %457 = vmatpush1.msra.mxu0 0.0
          %458 = vmatprep.subr.mxu0 0.0
          %459 = vmatpush1.msra.mxu0 0.0
          %460 = vmatprep.subr.mxu0 0.0
          %461 = vmatpush1.msra.mxu0 0.0
          %462 = vmatprep.subr.mxu0 0.0
          %463 = vmatpush1.msra.mxu0 0.0
          %464 = vmatprep.subr.mxu0 0.0
          %465 = vmatpush1.msra.mxu0 0.0
          %466 = vmatprep.mubr.f32.mxu0 0.0
          %467 = vmatmul.mubr.f32.gmra.mrb[0].mxu0 %v244
          %v468 = vpop.f32.mrb[0].mxu0
          %v469 = vadd.f32 %v322, %v468
          %v470 = vpop.f32.mrb[0].mxu0
          %v471 = vadd.f32 %v326, %v470
          %472 = vdwg.mxu0
          %473 = vst [vmem:[#allocation2] sm:$0xff] %v398
          %474 = vst [vmem:[#allocation2 + $0x8] sm:$0xff] %v400
          %475 = vst [vmem:[#allocation2 + $0x10] sm:$0xff] %v469
          %476 = vst [vmem:[#allocation2 + $0x18] sm:$0xff] %v471
          %v477 = vld [vmem:[%s4] sm:$0x1]
          %478 = vst [vmem:[#allocation3] sm:$0x1] %v477
          %v479 = vld [vmem:[%s4 + $0x1] sm:$0x1]
          %480 = vst [vmem:[#allocation4] sm:$0x1] %v479
        $region48: #{encoder_forward_sequence.3} parent=39 // pred_fallthru
          _
        %v481 = vld [vmem:[#allocation3] sm:$0x1]
        %v482 = vld [vmem:[#allocation4] sm:$0x1]
        %s483 = sshra.s32 %s22, 3
        %s484 = sand.u32 %s22, 7
        %s485 = sshra.s32 %s22, 3
        %s486 = sand.u32 %s22, 7
        %s487 = smul.u32 %s483, 4
        %s488 = smul.u32 %s487, 8
        %s489 = sadd.s32 %s488, %s486
        %s490 = scalar_lea.vmem [#allocation2], %s489
        %v491 = vld [vmem:[%s490] ss:$8 sm:$0xf]
        %v492 = vld [vmem:[%s2] sm:$0xff]
        %v493 = vld [vmem:[%s2 + $0x8] sm:$0xff]
        %v494 = vld [vmem:[%s2 + $0x10] sm:$0xff]
        %v495 = vld [vmem:[%s2 + $0x18] sm:$0xff]
        %v496 = vld [vmem:[%s2 + $0x20] sm:$0xff]
        %v497 = vld [vmem:[%s2 + $0x28] sm:$0xff]
        %v498 = vld [vmem:[%s2 + $0x30] sm:$0xff]
        %v499 = vld [vmem:[%s2 + $0x38] sm:$0xff]
        %v500 = vld [vmem:[%s2 + $0x40] sm:$0xff]
        %v501 = vld [vmem:[%s2 + $0x48] sm:$0xff]
        %v502 = vld [vmem:[%s2 + $0x50] sm:$0xff]
        %v503 = vld [vmem:[%s2 + $0x58] sm:$0xff]
        %v504 = vld [vmem:[%s2 + $0x60] sm:$0xff]
        %v505 = vld [vmem:[%s2 + $0x68] sm:$0xff]
        %v506 = vld [vmem:[%s2 + $0x70] sm:$0xff]
        %v507 = vld [vmem:[%s2 + $0x78] sm:$0xff]
        %v508 = vld [vmem:[%s2 + $0x80] sm:$0xff]
        %v509 = vld [vmem:[%s2 + $0x88] sm:$0xff]
        %v510 = vld [vmem:[%s2 + $0x90] sm:$0xff]
        %v511 = vld [vmem:[%s2 + $0x98] sm:$0xff]
        %v512 = vld [vmem:[%s2 + $0xa0] sm:$0xff]
        %v513 = vld [vmem:[%s2 + $0xa8] sm:$0xff]
        %v514 = vld [vmem:[%s2 + $0xb0] sm:$0xff]
        %v515 = vld [vmem:[%s2 + $0xb8] sm:$0xff]
        %v516 = vld [vmem:[%s2 + $0xc0] sm:$0xff]
        %v517 = vld [vmem:[%s2 + $0xc8] sm:$0xff]
        %v518 = vld [vmem:[%s2 + $0xd0] sm:$0xff]
        %v519 = vld [vmem:[%s2 + $0xd8] sm:$0xff]
        %v520 = vld [vmem:[%s2 + $0xe0] sm:$0xff]
        %v521 = vld [vmem:[%s2 + $0xe8] sm:$0xff]
        %v522 = vld [vmem:[%s2 + $0xf0] sm:$0xff]
        %v523 = vld [vmem:[%s2 + $0xf8] sm:$0xff]
        %v524 = vld [vmem:[%s2 + $0x100] sm:$0xff]
        %v525 = vld [vmem:[%s2 + $0x108] sm:$0xff]
        %v526 = vld [vmem:[%s2 + $0x110] sm:$0xff]
        %v527 = vld [vmem:[%s2 + $0x118] sm:$0xff]
        %v528 = vld [vmem:[%s2 + $0x120] sm:$0xff]
        %v529 = vld [vmem:[%s2 + $0x128] sm:$0xff]
        %v530 = vld [vmem:[%s2 + $0x130] sm:$0xff]
        %v531 = vld [vmem:[%s2 + $0x138] sm:$0xff]
        %v532 = vld [vmem:[%s2 + $0x140] sm:$0xff]
        %v533 = vld [vmem:[%s2 + $0x148] sm:$0xff]
        %v534 = vld [vmem:[%s2 + $0x150] sm:$0xff]
        %v535 = vld [vmem:[%s2 + $0x158] sm:$0xff]
        %v536 = vld [vmem:[%s2 + $0x160] sm:$0xff]
        %v537 = vld [vmem:[%s2 + $0x168] sm:$0xff]
        %v538 = vld [vmem:[%s2 + $0x170] sm:$0xff]
        %v539 = vld [vmem:[%s2 + $0x178] sm:$0xff]
        %v540 = vld [vmem:[%s2 + $0x180] sm:$0xff]
        %v541 = vld [vmem:[%s2 + $0x188] sm:$0xff]
        %v542 = vld [vmem:[%s2 + $0x190] sm:$0xff]
        %v543 = vld [vmem:[%s2 + $0x198] sm:$0xff]
        %v544 = vld [vmem:[%s2 + $0x1a0] sm:$0xff]
        %v545 = vld [vmem:[%s2 + $0x1a8] sm:$0xff]
        %v546 = vld [vmem:[%s2 + $0x1b0] sm:$0xff]
        %v547 = vld [vmem:[%s2 + $0x1b8] sm:$0xff]
        %v548 = vld [vmem:[%s2 + $0x1c0] sm:$0xff]
        %v549 = vld [vmem:[%s2 + $0x1c8] sm:$0xff]
        %v550 = vld [vmem:[%s2 + $0x1d0] sm:$0xff]
        %v551 = vld [vmem:[%s2 + $0x1d8] sm:$0xff]
        %v552 = vld [vmem:[%s2 + $0x1e0] sm:$0xff]
        %v553 = vld [vmem:[%s2 + $0x1e8] sm:$0xff]
        %v554 = vld [vmem:[%s2 + $0x1f0] sm:$0xff]
        %v555 = vld [vmem:[%s2 + $0x1f8] sm:$0xff]
        %556 = vmatprep.subr.mxu0 %v493
        %557 = vmatpush1.msra.mxu0 %v492
        %558 = vmatprep.subr.mxu0 %v497
        %559 = vmatpush1.msra.mxu0 %v496
        %560 = vmatprep.subr.mxu0 %v501
        %561 = vmatpush1.msra.mxu0 %v500
        %562 = vmatprep.subr.mxu0 %v505
        %563 = vmatpush1.msra.mxu0 %v504
        %564 = vmatprep.subr.mxu0 %v509
        %565 = vmatpush1.msra.mxu0 %v508
        %566 = vmatprep.subr.mxu0 %v513
        %567 = vmatpush1.msra.mxu0 %v512
        %568 = vmatprep.subr.mxu0 %v517
        %569 = vmatpush1.msra.mxu0 %v516
        %570 = vmatprep.subr.mxu0 %v521
        %571 = vmatpush1.msra.mxu0 %v520
        %572 = vmatprep.subr.mxu0 %v525
        %573 = vmatpush1.msra.mxu0 %v524
        %574 = vmatprep.subr.mxu0 %v529
        %575 = vmatpush1.msra.mxu0 %v528
        %576 = vmatprep.subr.mxu0 %v533
        %577 = vmatpush1.msra.mxu0 %v532
        %578 = vmatprep.subr.mxu0 %v537
        %579 = vmatpush1.msra.mxu0 %v536
        %580 = vmatprep.subr.mxu0 %v541
        %581 = vmatpush1.msra.mxu0 %v540
        %582 = vmatprep.subr.mxu0 %v545
        %583 = vmatpush1.msra.mxu0 %v544
        %584 = vmatprep.subr.mxu0 %v549
        %585 = vmatpush1.msra.mxu0 %v548
        %586 = vmatprep.subr.mxu0 %v553
        %587 = vmatpush1.msra.mxu0 %v552
        %588 = vmatprep.subr.mxu0 0.0
        %589 = vmatpush1.msra.mxu0 0.0
        %590 = vmatprep.subr.mxu0 0.0
        %591 = vmatpush1.msra.mxu0 0.0
        %592 = vmatprep.subr.mxu0 0.0
        %593 = vmatpush1.msra.mxu0 0.0
        %594 = vmatprep.subr.mxu0 0.0
        %595 = vmatpush1.msra.mxu0 0.0
        %596 = vmatprep.subr.mxu0 0.0
        %597 = vmatpush1.msra.mxu0 0.0
        %598 = vmatprep.subr.mxu0 0.0
        %599 = vmatpush1.msra.mxu0 0.0
        %600 = vmatprep.subr.mxu0 0.0
        %601 = vmatpush1.msra.mxu0 0.0
        %602 = vmatprep.subr.mxu0 0.0
        %603 = vmatpush1.msra.mxu0 0.0
        %604 = vmatprep.subr.mxu0 0.0
        %605 = vmatpush1.msra.mxu0 0.0
        %606 = vmatprep.subr.mxu0 0.0
        %607 = vmatpush1.msra.mxu0 0.0
        %608 = vmatprep.subr.mxu0 0.0
        %609 = vmatpush1.msra.mxu0 0.0
        %610 = vmatprep.subr.mxu0 0.0
        %611 = vmatpush1.msra.mxu0 0.0
        %612 = vmatprep.subr.mxu0 0.0
        %613 = vmatpush1.msra.mxu0 0.0
        %614 = vmatprep.subr.mxu0 0.0
        %615 = vmatpush1.msra.mxu0 0.0
        %616 = vmatprep.subr.mxu0 0.0
        %617 = vmatpush1.msra.mxu0 0.0
        %618 = vmatprep.subr.mxu0 0.0
        %619 = vmatpush1.msra.mxu0 0.0
        %620 = vmatprep.mubr.f32.mxu0 0.0
        %621 = vmatmul.mubr.f32.gmra.mrb[0].mxu0 %v481
        %v622 = vpop.f32.mrb[0].mxu0
        %v623 = vadd.f32 0.0, %v622
        %v624 = vpop.f32.mrb[0].mxu0
        %v625 = vadd.f32 0.0, %v624
        %626 = vdwg.mxu0
        %627 = vmatprep.subr.mxu0 %v495
        %628 = vmatpush1.msra.mxu0 %v494
        %629 = vmatprep.subr.mxu0 %v499
        %630 = vmatpush1.msra.mxu0 %v498
        %631 = vmatprep.subr.mxu0 %v503
        %632 = vmatpush1.msra.mxu0 %v502
        %633 = vmatprep.subr.mxu0 %v507
        %634 = vmatpush1.msra.mxu0 %v506
        %635 = vmatprep.subr.mxu0 %v511
        %636 = vmatpush1.msra.mxu0 %v510
        %637 = vmatprep.subr.mxu0 %v515
        %638 = vmatpush1.msra.mxu0 %v514
        %639 = vmatprep.subr.mxu0 %v519
        %640 = vmatpush1.msra.mxu0 %v518
        %641 = vmatprep.subr.mxu0 %v523
        %642 = vmatpush1.msra.mxu0 %v522
        %643 = vmatprep.subr.mxu0 %v527
        %644 = vmatpush1.msra.mxu0 %v526
        %645 = vmatprep.subr.mxu0 %v531
        %646 = vmatpush1.msra.mxu0 %v530
        %647 = vmatprep.subr.mxu0 %v535
        %648 = vmatpush1.msra.mxu0 %v534
        %649 = vmatprep.subr.mxu0 %v539
        %650 = vmatpush1.msra.mxu0 %v538
        %651 = vmatprep.subr.mxu0 %v543
        %652 = vmatpush1.msra.mxu0 %v542
        %653 = vmatprep.subr.mxu0 %v547
        %654 = vmatpush1.msra.mxu0 %v546
        %655 = vmatprep.subr.mxu0 %v551
        %656 = vmatpush1.msra.mxu0 %v550
        %657 = vmatprep.subr.mxu0 %v555
        %658 = vmatpush1.msra.mxu0 %v554
        %659 = vmatprep.subr.mxu0 0.0
        %660 = vmatpush1.msra.mxu0 0.0
        %661 = vmatprep.subr.mxu0 0.0
        %662 = vmatpush1.msra.mxu0 0.0
        %663 = vmatprep.subr.mxu0 0.0
        %664 = vmatpush1.msra.mxu0 0.0
        %665 = vmatprep.subr.mxu0 0.0
        %666 = vmatpush1.msra.mxu0 0.0
        %667 = vmatprep.subr.mxu0 0.0
        %668 = vmatpush1.msra.mxu0 0.0
        %669 = vmatprep.subr.mxu0 0.0
        %670 = vmatpush1.msra.mxu0 0.0
        %671 = vmatprep.subr.mxu0 0.0
        %672 = vmatpush1.msra.mxu0 0.0
        %673 = vmatprep.subr.mxu0 0.0
        %674 = vmatpush1.msra.mxu0 0.0
        %675 = vmatprep.subr.mxu0 0.0
        %676 = vmatpush1.msra.mxu0 0.0
        %677 = vmatprep.subr.mxu0 0.0
        %678 = vmatpush1.msra.mxu0 0.0
        %679 = vmatprep.subr.mxu0 0.0
        %680 = vmatpush1.msra.mxu0 0.0
        %681 = vmatprep.subr.mxu0 0.0
        %682 = vmatpush1.msra.mxu0 0.0
        %683 = vmatprep.subr.mxu0 0.0
        %684 = vmatpush1.msra.mxu0 0.0
        %685 = vmatprep.subr.mxu0 0.0
        %686 = vmatpush1.msra.mxu0 0.0
        %687 = vmatprep.subr.mxu0 0.0
        %688 = vmatpush1.msra.mxu0 0.0
        %689 = vmatprep.subr.mxu0 0.0
        %690 = vmatpush1.msra.mxu0 0.0
        %691 = vmatprep.mubr.f32.mxu0 0.0
        %692 = vmatmul.mubr.f32.gmra.mrb[0].mxu0 %v481
        %v693 = vpop.f32.mrb[0].mxu0
        %v694 = vadd.f32 0.0, %v693
        %v695 = vpop.f32.mrb[0].mxu0
        %v696 = vadd.f32 0.0, %v695
        %697 = vdwg.mxu0
        %v702 = vcombine.low %v623, %v625
        %v703 = vcombine.low %v694, %v696
        %v705 = vunpack.c.l.s4 1966171168
        %v706 = vunpack.c.0.s8 %v705
        %v707 = vlaneseq
        %v708 = vshrl.u32 %v707, 7
        %v709 = vsub.s32 %v706, %v708
        %v710 = vrot.slane %v702, %v709
        %v712 = vunpack.c.l.s4 1966171168
        %v713 = vunpack.c.0.s8 %v712
        %v714 = vlaneseq
        %v715 = vshrl.u32 %v714, 7
        %v716 = vsub.s32 %v713, %v715
        %v717 = vrot.slane %v703, %v716
        %v718 = vcombine.low %v710, %v717
        %v720 = vunpack.c.l.s4 1966171168
        %v721 = vunpack.c.0.s8 %v720
        %v722 = vlaneseq
        %v723 = vshrl.u32 %v722, 7
        %v724 = vsub.s32 %v721, %v723
        %v725 = vrot.slane %v718, %v724
        %v727 = vadd.f32 %v491, %v725
        %v728 = vxor.u32 %v727, 2147483648
        %v729 = vmul.f32 %v728, 1.442695
        %v730 = vpow.pop %v729
        %v731 = vadd.f32 %v730, 1.0
        %v732 = vrcp.pop %v731
        %v733 = vmul.f32 1.0, %v732
        %v735 = vrot.slane %v727, 1
        %v737 = vxor.u32 %v735, 2147483648
        %v738 = vmul.f32 %v737, 1.442695
        %v739 = vpow.pop %v738
        %v740 = vadd.f32 %v739, 1.0
        %v741 = vrcp.pop %v740
        %v742 = vmul.f32 1.0, %v741
        %v743 = vrot.slane %v727, 2
        %v745 = vtanh.pop %v743
        %v746 = vrot.slane %v727, 3
        %v748 = vxor.u32 %v746, 2147483648
        %v749 = vmul.f32 %v748, 1.442695
        %v750 = vpow.pop %v749
        %v751 = vadd.f32 %v750, 1.0
        %v752 = vrcp.pop %v751
        %v753 = vmul.f32 1.0, %v752
        %v754 = vmul.f32 %v742, %v482
        %v755 = vmul.f32 %v733, %v745
        %v756 = vadd.f32 %v754, %v755
        %v757 = vtanh.pop %v756
        %v758 = vmul.f32 %v753, %v757
        %759 = vst [vmem:[#allocation3] sm:$0x1] %v758
        %760 = vst [vmem:[#allocation4] sm:$0x1] %v756
        %761 = vst [vmem:[%s237] sm:$0x1] %v758
        %p762 = scmp.eq.s32.totalorder %s22, 7
        // Predicated region
        $region49: #{encoder_forward_sequence.3} parent=39 // pred_check
          %p763 = pneg %p762
        $region50: #{encoder_forward_sequence.3} parent=39 // pred_check_branch
          %765 = sbr.rel (%p763) target = $region52
        $region51: #{encoder_forward_sequence.3} parent=39 // pred_region
          %766 = vst [vmem:[%s6] sm:$0x1] %v758
          %767 = vst [vmem:[%s6 + $0x1] sm:$0x1] %v756
        $region52: #{encoder_forward_sequence.3} parent=39 // pred_fallthru
          _
        %s768 = sand.u32 %s135, 1
        %s769 = scalar_lea.sflag [#allocation7], %s768
        %s770 = sand.u32 %s135, 1
        %s771 = scalar_lea.vmem [#allocation8], %s770
        // Predicated region
        $region53: #{encoder_forward_sequence.3} parent=39 // pred_check
          %p772 = pneg %p145
        $region54: #{encoder_forward_sequence.3} parent=39 // pred_check_branch
          %774 = sbr.rel (%p772) target = $region56
        $region55: #{encoder_forward_sequence.3} parent=39 // pred_region
          %s776 = ssub.s32 16, 16
          %777 = vsyncadd %s769, %s776
          %s778 = smul.addr %s22, 16
          %s779 = scalar_lea.hbm %s5, %s778
          %s781 = sshll.u32 %s771, 4
          %s782 = int_to_ptr.vmem [resolvable:$true] %s781
          %784 = dma.vmem_to_hbm [thread:$0]  %s782, 16, %s779, %s769
        $region56: #{encoder_forward_sequence.3} parent=39 // pred_fallthru
          _
        // Predicated region
        $region57: #{encoder_forward_sequence.3} parent=39 // pred_check
          %p785 = pneg %p166
        $region58: #{encoder_forward_sequence.3} parent=39 // pred_check_branch
          %787 = sbr.rel (%p785) target = $region60
        $region59: #{encoder_forward_sequence.3} parent=39 // pred_region
          _
        $region60: #{encoder_forward_sequence.3} parent=39 // pred_fallthru
          _
        // Predicated region
        $region61: #{encoder_forward_sequence.3} parent=39 // pred_check
          %p788 = pneg %p166
        $region62: #{encoder_forward_sequence.3} parent=39 // pred_check_branch
          %790 = sbr.rel (%p788) target = $region64
        $region63: #{encoder_forward_sequence.3} parent=39 // pred_region
          _
        $region64: #{encoder_forward_sequence.3} parent=39 // pred_fallthru
          _
      $region40: #{encoder_forward_sequence.3} parent=5 // pred_fallthru
        _
      %p791 = scmp.le.s32.totalorder 2, %s17
      // Predicated region
      $region65: #{encoder_forward_sequence.3} parent=5 // pred_check
        %p792 = pneg %p791
      $region66: #{encoder_forward_sequence.3} parent=5 // pred_check_branch
        %794 = sbr.rel (%p792) target = $region68
      $region67: #{encoder_forward_sequence.3} parent=5 // pred_region
        %s795 = ssub.s32 %s17, 2
        // Predicated region
        $region69: #{encoder_forward_sequence.3} parent=67 // pred_check
          %p796 = pneg %p151
        $region70: #{encoder_forward_sequence.3} parent=67 // pred_check_branch
          %798 = sbr.rel (%p796) target = $region72
        $region71: #{encoder_forward_sequence.3} parent=67 // pred_region
          %s799 = sand.u32 %s136, 1
          %s800 = scalar_lea.sflag [#allocation7], %s799
          %s801 = sand.u32 %s136, 1
          %s802 = scalar_lea.vmem [#allocation8], %s801
          %803 = dma.done %s800, 16
        $region72: #{encoder_forward_sequence.3} parent=67 // pred_fallthru
          _
      $region68: #{encoder_forward_sequence.3} parent=5 // pred_fallthru
        _
    $region6: #{encoder_forward_sequence.3} parent=1 // loop_footer
      %s21 = sadd.s32 1, %s17
    $region7: #{encoder_forward_sequence.3} parent=1 // loop_footer_branch
      %16 = sbr.rel target = $region3
    $region8: #{encoder_forward_sequence.3} parent=1 // loop_exit
      _
    %804 = vsyncpa [#allocation6], 1
    %s805 = scalar_lea.sflag [#allocation6], 1
    %806 = vsyncpa %s805, 1
    %807 = vsyncpa [#allocation7], 1
    %s808 = scalar_lea.sflag [#allocation7], 1
    %809 = vsyncpa %s808, 1

</llo_original>
